<compile_context>
chip_gen: v6e
topology: v6e:2x2x1
jax: 0.10.0
libtpu: 0.0.40
codegen_flags: <defaults>
</compile_context>

<pallas_src>
import functools

import jax
import jax.numpy as jnp
from jax.experimental import pallas as pl
from jax.experimental.pallas import tpu as pltpu

IN_FEATURES = 84
OUT_FEATURES = 10
DEFAULT_TILE_B = 16384  # rows per grid step; kept a multiple of 128


def _round_up(n, m):
    return ((n + m - 1) // m) * m


def _block_bytes(rows, cols, dtype):
    """VMEM bytes for one (rows, cols) block after lane/sublane padding."""
    item = jnp.dtype(dtype).itemsize
    sublane_pack = 32 // item  # 8 for f32, 16 for bf16
    return _round_up(rows, sublane_pack) * _round_up(cols, 128) * item


def _padded_vmem_bytes(tile_b, x_dtype, out_dtype):
    """Double-buffered VMEM footprint of all pipelined blocks (padded sizes)."""
    x_blk = _block_bytes(tile_b, IN_FEATURES, x_dtype)          # (tile_b, 84->128)
    o_blk = _block_bytes(OUT_FEATURES, tile_b, out_dtype)       # (10->pad, tile_b)
    w_blk = _block_bytes(OUT_FEATURES, IN_FEATURES, x_dtype)    # (10, 84->128)
    b_blk = _block_bytes(OUT_FEATURES, 1, jnp.float32)          # (10, 1->128)
    return 2 * (x_blk + o_blk + w_blk + b_blk)                  # each operand double-buffered


def _f5_kernel(x_ref, w_ref, b_ref, ot_ref):
    # x_ref: (tile_b, 84), w_ref: (10, 84) [PyTorch layout], b_ref: (10, 1) f32,
    # ot_ref: (10, tile_b) -- transposed output, lane-dense along the batch dim.
    x = x_ref[...]
    w = w_ref[...]
    b = b_ref[...]

    # logits_t[c, i] = sum_k w[c, k] * x[i, k]; MXU with f32 accumulation.
    logits_t = jnp.einsum(
        "ok,bk->ob", w, x, preferred_element_type=jnp.float32
    ) + b  # (10, tile_b) f32

    # Numerically stable log-softmax over the class axis (axis 0 == sublanes),
    # so every EUP push (exp/log) runs on a fully populated 128-lane vreg.
    m = jnp.max(logits_t, axis=0, keepdims=True)          # (1, tile_b)
    shifted = logits_t - m
    lse = jnp.log(jnp.sum(jnp.exp(shifted), axis=0, keepdims=True))
    ot_ref[...] = (shifted - lse).astype(ot_ref.dtype)     # lane-dense, unmasked store


@functools.partial(jax.jit, static_argnames=("tile_b",))
def f5_forward(x, w, b, *, tile_b=DEFAULT_TILE_B):
    """x: (B, 84); w: (10, 84) (PyTorch nn.Linear.weight layout); b: (10,).

    Returns (B, 10) log-probabilities, matching Linear(84, 10) + LogSoftmax(-1).
    """
    B = x.shape[0]
    assert x.shape[1] == IN_FEATURES

    # tile_b must be a multiple of 128 (lane dim of the transposed output
    # block); clamp to the batch for small inputs.
    tile_b = _round_up(max(1, min(tile_b, B)), 128)
    grid = (pl.cdiv(B, tile_b),)

    # Keep the MXU feed in x's dtype (tiny cast; 840 weights).  Bias stays f32.
    w = w.astype(x.dtype)
    b2d = b.astype(jnp.float32).reshape(OUT_FEATURES, 1)

    x_item = jnp.dtype(x.dtype).itemsize
    cost = pl.CostEstimate(
        flops=2 * B * IN_FEATURES * OUT_FEATURES,
        transcendentals=B * (OUT_FEATURES + 1),  # exp per class + one log per row
        bytes_accessed=(
            B * IN_FEATURES * x_item
            + B * OUT_FEATURES * x_item
            + OUT_FEATURES * IN_FEATURES * x_item
            + OUT_FEATURES * 4
        ),
    )

    vmem_need = _padded_vmem_bytes(tile_b, x.dtype, x.dtype)
    vmem_limit = int(min(max(vmem_need + vmem_need // 2, 8 << 20), 48 << 20))

    out_t = pl.pallas_call(
        _f5_kernel,
        out_shape=jax.ShapeDtypeStruct((OUT_FEATURES, B), x.dtype),
        grid=grid,
        in_specs=[
            # x: batch-tiled, pipelined/double-buffered by BlockSpec.
            pl.BlockSpec((tile_b, IN_FEATURES), lambda i: (i, 0)),
            # W, bias: full arrays, VMEM-resident across all grid steps.
            pl.BlockSpec((OUT_FEATURES, IN_FEATURES), lambda i: (0, 0)),
            pl.BlockSpec((OUT_FEATURES, 1), lambda i: (0, 0)),
        ],
        # Transposed (10, B) output so stores are lane-dense along batch.
        out_specs=pl.BlockSpec((OUT_FEATURES, tile_b), lambda i: (0, i)),
        compiler_params=pltpu.CompilerParams(
            dimension_semantics=("parallel",),  # megacore-shard batch tiles (v7x)
            vmem_limit_bytes=vmem_limit,
        ),
        cost_estimate=cost,
    )(x, w, b2d)

    return out_t.T  # (B, 10), module-native orientation


def init_params(key):
    """nn.Linear default init: U(-1/sqrt(fan_in), +1/sqrt(fan_in)), PyTorch layout."""
    kw, kb = jax.random.split(key)
    bound = 1.0 / (IN_FEATURES ** 0.5)
    w = jax.random.uniform(
        kw, (OUT_FEATURES, IN_FEATURES), jnp.float32, minval=-bound, maxval=bound
    )
    b = jax.random.uniform(
        kb, (OUT_FEATURES,), jnp.float32, minval=-bound, maxval=bound
    )
    return w, b


def reference_forward(x, w, b):
    wf = w.astype(x.dtype).astype(jnp.float32)
    logits = x.astype(jnp.float32) @ wf.T + b.astype(jnp.float32)
    return jax.nn.log_softmax(logits, axis=-1).astype(x.dtype)


if __name__ == "__main__":
    key = jax.random.PRNGKey(0)
    k_x, k_x2, k_p = jax.random.split(key, 3)
    w, b = init_params(k_p)

    # Small demo shape consistent with the module: batch=2, 84 features.
    batch = 2
    x = jax.random.normal(k_x, (batch, IN_FEATURES), jnp.float32)
    out = jax.block_until_ready(f5_forward(x, w, b))
    assert out.shape == (batch, OUT_FEATURES)
    assert jnp.allclose(out, reference_forward(x, w, b), atol=1e-5, rtol=1e-5)

    # Exercise the multi-tile pipelined path (3 grid steps incl. a partial tile).
    x2 = jax.random.normal(k_x2, (300, IN_FEATURES), jnp.float32)
    out2 = jax.block_until_ready(f5_forward(x2, w, b, tile_b=128))
    assert out2.shape == (300, OUT_FEATURES)
    assert jnp.allclose(out2, reference_forward(x2, w, b), atol=1e-5, rtol=1e-5)

    # bf16 x end-to-end (halves the dominant HBM read); accumulation stays f32.
    x3 = x2.astype(jnp.bfloat16)
    out3 = jax.block_until_ready(f5_forward(x3, w, b, tile_b=128))
    assert out3.shape == (300, OUT_FEATURES)
    assert jnp.allclose(
        out3.astype(jnp.float32),
        reference_forward(x3, w, b).astype(jnp.float32),
        atol=5e-2, rtol=5e-2,
    )

    print("KERNEL_OK")
</pallas_src>

<mosaic_0001>
module attributes {stable_mosaic.version = 11 : i64} {
  func.func @_f5_kernel(%arg0: i32, %arg1: memref<128x84xf32, #tpu.memory_space<vmem>>, %arg2: memref<10x84xf32, #tpu.memory_space<vmem>>, %arg3: memref<10x1xf32, #tpu.memory_space<vmem>>, %arg4: memref<10x128xf32, #tpu.memory_space<vmem>>) attributes {dimension_semantics = [#tpu.dimension_semantics<parallel>], iteration_bounds = array<i64: 1>, scalar_prefetch = 0 : i64, scratch_operands = 0 : i64, tpu.core_type = #tpu.core_type<tc>, window_params = [{transform_indices = @transform_0, window_bounds = array<i64: 128, 84>}, {pipeline_mode = #tpu.pipeline_mode<synchronous>, transform_indices = @transform_1, window_bounds = array<i64: 10, 84>}, {pipeline_mode = #tpu.pipeline_mode<synchronous>, transform_indices = @transform_2, window_bounds = array<i64: 10, 1>}, {transform_indices = @transform_3, window_bounds = array<i64: 10, 128>}]} {
    %c0 = arith.constant 0 : index
    %c0_0 = arith.constant 0 : index
    %0 = vector.load %arg1[%c0, %c0_0] : memref<128x84xf32, #tpu.memory_space<vmem>>, vector<128x84xf32>
    %c0_1 = arith.constant 0 : index
    %c0_2 = arith.constant 0 : index
    %1 = vector.load %arg2[%c0_1, %c0_2] : memref<10x84xf32, #tpu.memory_space<vmem>>, vector<10x84xf32>
    %c0_3 = arith.constant 0 : index
    %c0_4 = arith.constant 0 : index
    %2 = vector.load %arg3[%c0_3, %c0_4] : memref<10x1xf32, #tpu.memory_space<vmem>>, vector<10x1xf32>
    "tpu.trace_start"() <{level = 10 : i32, message = "ok,bk->ob"}> : () -> ()
    %cst = arith.constant dense<0.000000e+00> : vector<10x128xf32>
    %3 = tpu.matmul %1, %0, %cst {dimension_numbers = #tpu.dot_dimension_numbers<[1], [1], [0], [0], [0, 0, 1, 0], [], []>} : vector<10x84xf32>, vector<128x84xf32>, vector<10x128xf32> -> vector<10x128xf32>
    "tpu.trace_stop"() : () -> ()
    %4 = vector.broadcast %2 : vector<10x1xf32> to vector<10x128xf32>
    %5 = arith.addf %3, %4 : vector<10x128xf32>
    %cst_5 = arith.constant dense<0xFF800000> : vector<128xf32>
    %6 = vector.multi_reduction <maximumf>, %5, %cst_5 [0] : vector<10x128xf32> to vector<128xf32>
    %7 = vector.shape_cast %6 : vector<128xf32> to vector<1x128xf32>
    %8 = vector.broadcast %7 : vector<1x128xf32> to vector<10x128xf32>
    %9 = arith.subf %5, %8 : vector<10x128xf32>
    %10 = math.exp %9 : vector<10x128xf32>
    %cst_6 = arith.constant dense<0.000000e+00> : vector<128xf32>
    %11 = vector.multi_reduction <add>, %10, %cst_6 [0] : vector<10x128xf32> to vector<128xf32>
    %12 = vector.shape_cast %11 : vector<128xf32> to vector<1x128xf32>
    %13 = math.log %12 : vector<1x128xf32>
    %14 = vector.broadcast %13 : vector<1x128xf32> to vector<10x128xf32>
    %15 = arith.subf %9, %14 : vector<10x128xf32>
    %c0_7 = arith.constant 0 : index
    %c0_8 = arith.constant 0 : index
    %16 = vector.load %arg4[%c0_7, %c0_8] : memref<10x128xf32, #tpu.memory_space<vmem>>, vector<10x128xf32>
    tpu.vector_store %arg4[%c0_7, %c0_8], %15 {strides = array<i32>} : memref<10x128xf32, #tpu.memory_space<vmem>>, vector<10x128xf32>,
    return
  }
  func.func @transform_0(%arg0: i32) -> (i32, i32) {
    %c0_i32 = arith.constant 0 : i32
    %c0_i32_0 = arith.constant 0 : i32
    return %arg0, %c0_i32 : i32, i32
  }
  func.func @transform_1(%arg0: i32) -> (i32, i32) {
    %c0_i32 = arith.constant 0 : i32
    %c0_i32_0 = arith.constant 0 : i32
    %c0_i32_1 = arith.constant 0 : i32
    return %c0_i32, %c0_i32_0 : i32, i32
  }
  func.func @transform_2(%arg0: i32) -> (i32, i32) {
    %c0_i32 = arith.constant 0 : i32
    %c0_i32_0 = arith.constant 0 : i32
    %c0_i32_1 = arith.constant 0 : i32
    return %c0_i32, %c0_i32_0 : i32, i32
  }
  func.func @transform_3(%arg0: i32) -> (i32, i32) {
    %c0_i32 = arith.constant 0 : i32
    %c0_i32_0 = arith.constant 0 : i32
    return %c0_i32, %arg0 : i32, i32
  }
}

</mosaic_0001>

<llo_original>
// kernel: f5_forward.1
$region0: #{f5_forward.1}
  #allocation0 [shape = 'u32[]', space=smem, size = 0x4, offset = 0x4, fixed_abs, tag = 'smem constant byte address 0x4 - core index']
  #allocation1 [shape = 'u32[144,128]{1,0:T(1,128)}', space=vmem, size = 0x12000, scoped, tag = 'internal scratch']
  %s0 = inlined_call_operand.vmem [shape: f32[2,84], index: 0, kind: input, shape index: {}]
  %s1 = inlined_call_operand.vmem [shape: f32[10,84], index: 1, kind: input, shape index: {}]
  %s2 = inlined_call_operand.vmem [shape: f32[10,1], index: 2, kind: input, shape index: {}]
  %s3 = inlined_call_operand.vmem [shape: f32[10,2], index: 3, kind: output, shape index: {}]
  %s4 = sld [smem:[#allocation0]]
  $region22: #{f5_forward.1} parent=0
    _
  %s6 = ssub.s32 1, %s4
  %s7 = scalar_select 0, %s6, %s4
  // Predicated region
  $region2: #{f5_forward.1} parent=0 // pred_check
    _
  $region3: #{f5_forward.1} parent=0 // pred_check_branch
    %9 = sbr.rel (0) target = $region5
  $region4: #{f5_forward.1} parent=0 // pred_region
    _
  $region5: #{f5_forward.1} parent=0 // pred_fallthru
    _
  // Predicated region
  $region6: #{f5_forward.1} parent=0 // pred_check
    _
  $region7: #{f5_forward.1} parent=0 // pred_check_branch
    %11 = sbr.rel (0) target = $region9
  $region8: #{f5_forward.1} parent=0 // pred_region
    _
  $region9: #{f5_forward.1} parent=0 // pred_fallthru
    _
  // Predicated region
  $region10: #{f5_forward.1} parent=0 // pred_check
    _
  $region11: #{f5_forward.1} parent=0 // pred_check_branch
    %13 = sbr.rel (0) target = $region13
  $region12: #{f5_forward.1} parent=0 // pred_region
    _
  $region13: #{f5_forward.1} parent=0 // pred_fallthru
    _
  %v14 = vld [vmem:[%s0] sm:$0xff]
  %v15 = vld [vmem:[%s0 + $0x8] sm:$0xff]
  %v16 = vld [vmem:[%s0 + $0x10] sm:$0xff]
  %v17 = vld [vmem:[%s0 + $0x18] sm:$0xff]
  %v18 = vld [vmem:[%s0 + $0x20] sm:$0xff]
  %v19 = vld [vmem:[%s0 + $0x28] sm:$0xff]
  %v20 = vld [vmem:[%s0 + $0x30] sm:$0xff]
  %v21 = vld [vmem:[%s0 + $0x38] sm:$0xff]
  %v22 = vld [vmem:[%s0 + $0x40] sm:$0xff]
  %v23 = vld [vmem:[%s0 + $0x48] sm:$0xff]
  %v24 = vld [vmem:[%s0 + $0x50] sm:$0xff]
  %v25 = vld [vmem:[%s0 + $0x58] sm:$0xff]
  %v26 = vld [vmem:[%s0 + $0x60] sm:$0xff]
  %v27 = vld [vmem:[%s0 + $0x68] sm:$0xff]
  %v28 = vld [vmem:[%s0 + $0x70] sm:$0xff]
  %v29 = vld [vmem:[%s0 + $0x78] sm:$0xff]
  %v30 = vld [vmem:[%s1] sm:$0xff]
  %v31 = vld [vmem:[%s1 + $0x8] sm:$0x3]
  %v32 = vld [vmem:[%s2] sm:$0xff]
  %v33 = vld [vmem:[%s2 + $0x8] sm:$0x3]
  %35 = vset.pattern.permute.xlu0 0
  %36 = vperm.xlu0 %35, %v32
  %v37 = vpop.permute.xlu0 %36
  %40 = vset.pattern.permute.xlu0 0
  %41 = vperm.xlu0 %40, %v33
  %v42 = vpop.permute.xlu0 %41
  %vm44 = vcmask 687104
  %v46 = vsel %vm44, %v30, 0
  %v49 = vsel %vm44, %v31, 0
  %v52 = vsel %vm44, %v14, 0
  %v55 = vsel %vm44, %v15, 0
  %v58 = vsel %vm44, %v16, 0
  %v61 = vsel %vm44, %v17, 0
  %v64 = vsel %vm44, %v18, 0
  %v67 = vsel %vm44, %v19, 0
  %v70 = vsel %vm44, %v20, 0
  %v73 = vsel %vm44, %v21, 0
  %v76 = vsel %vm44, %v22, 0
  %v79 = vsel %vm44, %v23, 0
  %v82 = vsel %vm44, %v24, 0
  %v85 = vsel %vm44, %v25, 0
  %v88 = vsel %vm44, %v26, 0
  %v91 = vsel %vm44, %v27, 0
  %v94 = vsel %vm44, %v28, 0
  %v97 = vsel %vm44, %v29, 0
  %99 = vmatprep.subr.mxu0 0.0
  %100 = vmatpush1.xpose.msra.mxu0 %v97
  %101 = vmatprep.subr.mxu0 0.0
  %102 = vmatpush1.xpose.msra.mxu0 %v94
  %103 = vmatprep.subr.mxu0 0.0
  %104 = vmatpush1.xpose.msra.mxu0 %v91
  %105 = vmatprep.subr.mxu0 0.0
  %106 = vmatpush1.xpose.msra.mxu0 %v88
  %107 = vmatprep.subr.mxu0 0.0
  %108 = vmatpush1.xpose.msra.mxu0 %v85
  %109 = vmatprep.subr.mxu0 0.0
  %110 = vmatpush1.xpose.msra.mxu0 %v82
  %111 = vmatprep.subr.mxu0 0.0
  %112 = vmatpush1.xpose.msra.mxu0 %v79
  %113 = vmatprep.subr.mxu0 0.0
  %114 = vmatpush1.xpose.msra.mxu0 %v76
  %115 = vmatprep.subr.mxu0 0.0
  %116 = vmatpush1.xpose.msra.mxu0 %v73
  %117 = vmatprep.subr.mxu0 0.0
  %118 = vmatpush1.xpose.msra.mxu0 %v70
  %119 = vmatprep.subr.mxu0 0.0
  %120 = vmatpush1.xpose.msra.mxu0 %v67
  %121 = vmatprep.subr.mxu0 0.0
  %122 = vmatpush1.xpose.msra.mxu0 %v64
  %123 = vmatprep.subr.mxu0 0.0
  %124 = vmatpush1.xpose.msra.mxu0 %v61
  %125 = vmatprep.subr.mxu0 0.0
  %126 = vmatpush1.xpose.msra.mxu0 %v58
  %127 = vmatprep.subr.mxu0 0.0
  %128 = vmatpush1.xpose.msra.mxu0 %v55
  %129 = vmatprep.subr.mxu0 0.0
  %130 = vmatpush1.xpose.msra.mxu0 %v52
  %131 = vmatprep.subr.mxu0 0.0
  %132 = vmatpush2.xpose.msra.mxu0 0.0
  %133 = vmatprep.subr.mxu0 0.0
  %134 = vmatpush2.xpose.msra.mxu0 0.0
  %135 = vmatprep.subr.mxu0 0.0
  %136 = vmatpush2.xpose.msra.mxu0 0.0
  %137 = vmatprep.subr.mxu0 0.0
  %138 = vmatpush2.xpose.msra.mxu0 0.0
  %139 = vmatprep.subr.mxu0 0.0
  %140 = vmatpush2.xpose.msra.mxu0 0.0
  %141 = vmatprep.subr.mxu0 0.0
  %142 = vmatpush2.xpose.msra.mxu0 0.0
  %143 = vmatprep.subr.mxu0 0.0
  %144 = vmatpush2.xpose.msra.mxu0 0.0
  %145 = vmatprep.subr.mxu0 0.0
  %146 = vmatpush2.xpose.msra.mxu0 0.0
  %147 = vmatprep.subr.mxu0 0.0
  %148 = vmatpush2.xpose.msra.mxu0 0.0
  %149 = vmatprep.subr.mxu0 0.0
  %150 = vmatpush2.xpose.msra.mxu0 0.0
  %151 = vmatprep.subr.mxu0 0.0
  %152 = vmatpush2.xpose.msra.mxu0 0.0
  %153 = vmatprep.subr.mxu0 0.0
  %154 = vmatpush2.xpose.msra.mxu0 0.0
  %155 = vmatprep.subr.mxu0 0.0
  %156 = vmatpush2.xpose.msra.mxu0 0.0
  %157 = vmatprep.subr.mxu0 0.0
  %158 = vmatpush2.xpose.msra.mxu0 0.0
  %159 = vmatprep.subr.mxu0 0.0
  %160 = vmatpush2.xpose.msra.mxu0 0.0
  %161 = vmatprep.subr.mxu0 0.0
  %162 = vmatpush2.xpose.msra.mxu0 0.0
  %163 = vmatprep.mubr.f32.mxu0 0.0
  %164 = vmatmul.mubr.f32.gmra.mxu0 %v46
  %v165 = vpop.f32.mrf.mxu0
  %v166 = vadd.f32 %v37, %v165
  %v167 = vpop.f32.mrf.mxu0
  %168 = vmatprep.mubr.f32.mxu0 0.0
  %169 = vmatmul.mubr.f32.gmra.mxu0 %v49
  %v170 = vpop.f32.mrf.mxu0
  %v171 = vadd.f32 %v42, %v170
  %v172 = vpop.f32.mrf.mxu0
  %173 = vdwg.mxu0
  %vm174 = vcmask 1041408
  %v175 = vsel %vm174, %v171, -inf
  %v176 = vmax.f32 %v166, %v175
  %v177 = vrot.slane %v176, 4
  %v178 = vmax.f32 %v176, %v177
  %v179 = vrot.slane %v178, 2
  %v180 = vmax.f32 %v178, %v179
  %v181 = vrot.slane %v180, 1
  %v182 = vmax.f32 %v180, %v181
  %v183 = vsub.f32 %v166, %v182
  %v184 = vsub.f32 %v171, %v182
  %v185 = vmul.f32 %v183, 1.442695
  %v186 = vpow.pop %v185
  %v187 = vmul.f32 %v184, 1.442695
  %v188 = vpow.pop %v187
  %v189 = vsel %vm174, %v188, 0.0
  %v190 = vadd.f32 %v186, %v189
  %v191 = vrot.slane %v190, 4
  %v192 = vadd.f32 %v190, %v191
  %v193 = vrot.slane %v192, 2
  %v194 = vadd.f32 %v192, %v193
  %v195 = vrot.slane %v194, 1
  %v196 = vadd.f32 %v194, %v195
  %v197 = vlog2.pop %v196
  %v198 = vmul.f32 %v197, 0.6931472
  %v199 = vsub.f32 %v183, %v198
  %v200 = vsub.f32 %v184, %v198
  %201 = vst [vmem:[%s3] sm:$0xff] %v199
  %202 = vst [vmem:[%s3 + $0x8] sm:$0x3] %v200
  // Predicated region
  $region14: #{f5_forward.1} parent=0 // pred_check
    _
  $region15: #{f5_forward.1} parent=0 // pred_check_branch
    %204 = sbr.rel (0) target = $region17
  $region16: #{f5_forward.1} parent=0 // pred_region
    _
  $region17: #{f5_forward.1} parent=0 // pred_fallthru
    _
  // Predicated region
  $region18: #{f5_forward.1} parent=0 // pred_check
    _
  $region19: #{f5_forward.1} parent=0 // pred_check_branch
    %206 = sbr.rel (0) target = $region21
  $region20: #{f5_forward.1} parent=0 // pred_region
    _
  $region21: #{f5_forward.1} parent=0 // pred_fallthru
    _

</llo_original>
